<compile_context>
chip_gen: v6e
topology: v6e:2x2x1
jax: 0.10.0
libtpu: 0.0.40
codegen_flags: <defaults>
</compile_context>

<pallas_src>
import jax
import jax.numpy as jnp
from jax.experimental import pallas as pl
from jax.experimental.pallas import tpu as pltpu


def _round_up(v, m):
    return ((v + m - 1) // m) * m


def protonet_kernel(x_ref, w1_ref, b1_ref, w2_ref, b2_ref, pt_ref, psq_ref,
                    emb_ref, dist_ref, h_acc):
    """One (batch-tile, K-tile) step of the fused encoder + prototype head.

    Grid: (batch tiles [parallel], K=din tiles [arbitrary, reduction]).

    x_ref:    (TB, KT)      f32    batch tile of flattened inputs
    w1_ref:   (KT, Hid)     bf16   K-tile of the first weight matrix
    b1_ref:   (1, Hid)      f32
    w2_ref:   (Hid, Dout)   f32
    b2_ref:   (1, Dout)     f32
    pt_ref:   (Dout, Ppad)  f32    prototypes, pre-transposed (padded cols)
    psq_ref:  (1, Ppad)     f32    ||p||^2 per (padded) prototype
    emb_ref:  (TB, Dout)           output 1: embeddings
    dist_ref: (TB, Ppad)           output 2: -L2 distances (padded cols)
    h_acc:    (TB, Hid)     f32    VMEM accumulator for the first matmul
    """
    k = pl.program_id(1)

    @pl.when(k == 0)
    def _init():
        h_acc[...] = jnp.zeros_like(h_acc)

    # The only matmul touching a big HBM operand: bf16 x bf16 on the MXU with
    # f32 accumulation across K tiles.  The bf16 cast of x happens here (VPU
    # has large slack in this mem-bound regime) so x is streamed from HBM
    # exactly once, as f32, with no wrapper-side pad/cast pass.
    h_acc[...] += jnp.dot(x_ref[...].astype(jnp.bfloat16), w1_ref[...],
                          preferred_element_type=jnp.float32)

    @pl.when(k == pl.num_programs(1) - 1)
    def _finalize():
        h = jnp.maximum(h_acc[...] + b1_ref[...], 0.0)
        emb = jnp.dot(h, w2_ref[...],
                      preferred_element_type=jnp.float32) + b2_ref[...]
        emb_ref[...] = emb.astype(emb_ref.dtype)

        # ProtoNet head: -||e - p|| via Gram form (MXU), not a (TB, P, D)
        # broadcast + cross-lane reduce.  max(d2, 0) guards tiny negative d2
        # from rounding before the sqrt.
        e_sq = jnp.sum(emb * emb, axis=-1, keepdims=True)            # (TB, 1)
        cross = jnp.dot(emb, pt_ref[...],
                        preferred_element_type=jnp.float32)          # (TB, Ppad)
        d2 = e_sq + psq_ref[...] - 2.0 * cross
        dist_ref[...] = (-jnp.sqrt(jnp.maximum(d2, 0.0))).astype(dist_ref.dtype)


def prepare_prototypes(prototypes):
    """Pad/transpose prototypes and precompute ||p||^2.

    Hoist this out of the hot path (call once) when prototypes are reused
    across many forward calls.
    """
    n_protos = prototypes.shape[0]
    p_pad = _round_up(n_protos, 128)       # lane-dense dist output / matmul N
    protos_p = jnp.pad(prototypes, ((0, p_pad - n_protos), (0, 0)))
    protos_t = protos_p.T                                          # (Dout, Ppad)
    protos_sq = jnp.sum(protos_p * protos_p, axis=-1)[None, :]     # (1, Ppad)
    return protos_t, protos_sq, n_protos


def protonet_forward(x_nchw, w1, b1, w2, b2, prototypes, *,
                     batch_tile=256, dist_dtype=jnp.float32,
                     w1_tile_budget_bytes=4 << 20, proto_prep=None):
    B = x_nchw.shape[0]
    din, hidden = w1.shape
    dout = w2.shape[1]

    # Glue: flatten NCHW -> (B, Din), row-major, matching torch's x.view(B, -1).
    x_flat = x_nchw.reshape(B, din)

    if proto_prep is None:
        proto_prep = prepare_prototypes(prototypes)
    protos_t, protos_sq, n_protos = proto_prep
    p_pad = protos_t.shape[1]

    # ---- batch tiling -------------------------------------------------------
    # No batch padding: grid = cdiv(B, tb).  The partial last tile reads
    # undefined rows that only flow into output rows Pallas masks on writeback
    # (no cross-row reduction inside the kernel).
    tb = min(batch_tile, _round_up(B, 16))
    if B > 32 and pl.cdiv(B, tb) < 2:
        # Ensure >= 2 grid steps so both TensorCores get work on v7x.
        tb = _round_up(pl.cdiv(B, 2), 16)
    nb = pl.cdiv(B, tb)

    # ---- K (din) tiling -----------------------------------------------------
    # Keep w1 as a single VMEM-resident K block when small; otherwise K-tile it
    # so 2 double-buffered bf16 tiles stay within budget (v7x: 64 MiB VMEM).
    if din * hidden * 2 <= 2 * w1_tile_budget_bytes:
        kt, din_p = din, din
        x_in, w1_in = x_flat, w1
    else:
        kt = max(128, (w1_tile_budget_bytes // (hidden * 2)) // 128 * 128)
        din_p = _round_up(din, kt)
        # Zero-pad K so a partial K tile never mixes undefined data into the
        # accumulation (only happens in the large-din fallback path).
        x_in = jnp.pad(x_flat, ((0, 0), (0, din_p - din)))
        w1_in = jnp.pad(w1, ((0, din_p - din), (0, 0)))
    nk = din_p // kt
    w1_bf = w1_in.astype(jnp.bfloat16)   # halves w1 HBM reads; f32 accumulation

    grid = (nb, nk)

    # Grid-invariant operands (tiny: < 100 KiB total since w1 is K-tiled, not
    # invariant) — double-buffering them costs almost nothing, so no
    # pipeline_mode override is needed.
    const_spec = lambda shape: pl.BlockSpec(shape, lambda i, k: (0, 0))

    in_specs = [
        pl.BlockSpec((tb, kt), lambda i, k: (i, k)),        # x (f32, streamed)
        pl.BlockSpec((kt, hidden), lambda i, k: (k, 0)),    # w1 (bf16, K-tiled)
        const_spec((1, hidden)),                            # b1
        const_spec((hidden, dout)),                         # w2
        const_spec((1, dout)),                              # b2
        const_spec((dout, p_pad)),                          # protos^T
        const_spec((1, p_pad)),                             # ||p||^2
    ]
    out_specs = (
        pl.BlockSpec((tb, dout), lambda i, k: (i, 0)),      # embeddings
        pl.BlockSpec((tb, p_pad), lambda i, k: (i, 0)),     # -distances
    )

    # Explicit VMEM limit sized from the tile footprint (v5e scoped default is
    # only 16 MiB); capped at v7x's 64 MiB physical VMEM.
    dist_bytes = jnp.dtype(dist_dtype).itemsize
    footprint = (2 * tb * kt * 4                  # x tile, double buffered
                 + 2 * kt * hidden * 2            # w1 tile, double buffered
                 + (hidden + hidden * dout + dout
                    + dout * p_pad + p_pad) * 4   # invariant operands
                 + 2 * tb * dout * 4              # emb out tile, double buffered
                 + 2 * tb * p_pad * dist_bytes    # dist out tile, double buffered
                 + tb * hidden * 4)               # accumulator scratch
    vmem_limit = int(min(64 << 20, max(32 << 20, 2 * footprint + (2 << 20))))

    flops = 2 * B * (din_p * hidden + hidden * dout + dout * p_pad)
    bytes_accessed = (B * din_p * 4                      # x read (f32, once)
                      + nb * din_p * hidden * 2          # w1 bf16, re-read per batch tile
                      + (hidden + hidden * dout + dout
                         + dout * p_pad + p_pad) * 4
                      + B * dout * 4 + B * p_pad * dist_bytes)

    emb, dist_p = pl.pallas_call(
        protonet_kernel,
        grid=grid,
        out_shape=(
            jax.ShapeDtypeStruct((B, dout), jnp.float32),    # embeddings
            jax.ShapeDtypeStruct((B, p_pad), dist_dtype),    # -distances (padded cols)
        ),
        in_specs=in_specs,
        out_specs=out_specs,
        scratch_shapes=[pltpu.VMEM((tb, hidden), jnp.float32)],
        compiler_params=pltpu.CompilerParams(
            dimension_semantics=("parallel", "arbitrary"),
            vmem_limit_bytes=vmem_limit,
        ),
        cost_estimate=pl.CostEstimate(
            flops=flops, transcendentals=0, bytes_accessed=bytes_accessed),
    )(x_in, w1_bf, b1, w2, b2, protos_t, protos_sq)

    # Strip prototype-column padding (batch is not padded).
    return emb, dist_p[:, :n_protos]


if __name__ == "__main__":
    # Small, deterministic shapes consistent with an NCHW-image encoder.
    B, C, H, W = 2, 4, 16, 16
    hidden = 32
    output_size = 32          # encoder.output_size
    n_protos = 8

    din = C * H * W
    key = jax.random.PRNGKey(0)
    k_x, k_w1, k_b1, k_w2, k_b2, k_p = jax.random.split(key, 6)

    x = jax.random.normal(k_x, (B, C, H, W), dtype=jnp.float32)

    # Deterministic synthetic encoder parameters (no checkpoint loading).
    w1 = 0.05 * jax.random.normal(k_w1, (din, hidden), dtype=jnp.float32)
    b1 = 0.05 * jax.random.normal(k_b1, (1, hidden), dtype=jnp.float32)
    w2 = 0.05 * jax.random.normal(k_w2, (hidden, output_size), dtype=jnp.float32)
    b2 = 0.05 * jax.random.normal(k_b2, (1, output_size), dtype=jnp.float32)
    # nn.Parameter(torch.rand((n_protos, output_size))) -> uniform [0, 1)
    prototypes = jax.random.uniform(k_p, (n_protos, output_size), dtype=jnp.float32)

    emb, dists = protonet_forward(x, w1, b1, w2, b2, prototypes)
    jax.block_until_ready((emb, dists))

    # Pure-JAX reference with the same bf16 quantization of (x, w1); the
    # distance head reference uses the direct broadcast form of the module.
    x_flat = x.reshape(B, -1)
    h_ref = jnp.maximum(
        jnp.dot(x_flat.astype(jnp.bfloat16), w1.astype(jnp.bfloat16),
                preferred_element_type=jnp.float32) + b1, 0.0)
    emb_ref = h_ref @ w2 + b2
    dists_ref = -jnp.linalg.norm(
        emb_ref[:, None, :] - prototypes[None, :, :], axis=-1)

    assert emb.shape == (B, output_size) and dists.shape == (B, n_protos)
    assert jnp.allclose(emb, emb_ref, atol=1e-4, rtol=1e-4), \
        float(jnp.max(jnp.abs(emb - emb_ref)))
    assert jnp.allclose(dists, dists_ref, atol=2e-3, rtol=2e-3), \
        float(jnp.max(jnp.abs(dists - dists_ref)))

    print("KERNEL_OK")
</pallas_src>

<mosaic_0001>
module attributes {stable_mosaic.version = 11 : i64} {
  func.func @protonet_kernel(%arg0: i32, %arg1: i32, %arg2: memref<16x1024xf32, #tpu.memory_space<vmem>>, %arg3: memref<1024x32xbf16, #tpu.memory_space<vmem>>, %arg4: memref<1x32xf32, #tpu.memory_space<vmem>>, %arg5: memref<32x32xf32, #tpu.memory_space<vmem>>, %arg6: memref<1x32xf32, #tpu.memory_space<vmem>>, %arg7: memref<32x128xf32, #tpu.memory_space<vmem>>, %arg8: memref<1x128xf32, #tpu.memory_space<vmem>>, %arg9: memref<16x32xf32, #tpu.memory_space<vmem>>, %arg10: memref<16x128xf32, #tpu.memory_space<vmem>>, %arg11: memref<16x32xf32, #tpu.memory_space<vmem>>) attributes {dimension_semantics = [#tpu.dimension_semantics<parallel>, #tpu.dimension_semantics<arbitrary>], iteration_bounds = array<i64: 1, 1>, scalar_prefetch = 0 : i64, scratch_operands = 1 : i64, tpu.core_type = #tpu.core_type<tc>, window_params = [{transform_indices = @transform_0, window_bounds = array<i64: 16, 1024>}, {transform_indices = @transform_1, window_bounds = array<i64: 1024, 32>}, {pipeline_mode = #tpu.pipeline_mode<synchronous>, transform_indices = @transform_2, window_bounds = array<i64: 1, 32>}, {pipeline_mode = #tpu.pipeline_mode<synchronous>, transform_indices = @transform_3, window_bounds = array<i64: 32, 32>}, {pipeline_mode = #tpu.pipeline_mode<synchronous>, transform_indices = @transform_4, window_bounds = array<i64: 1, 32>}, {pipeline_mode = #tpu.pipeline_mode<synchronous>, transform_indices = @transform_5, window_bounds = array<i64: 32, 128>}, {pipeline_mode = #tpu.pipeline_mode<synchronous>, transform_indices = @transform_6, window_bounds = array<i64: 1, 128>}, {transform_indices = @transform_7, window_bounds = array<i64: 16, 32>}, {transform_indices = @transform_8, window_bounds = array<i64: 16, 128>}]} {
    %c0_i32 = arith.constant 0 : i32
    %0 = arith.cmpi eq, %arg1, %c0_i32 : i32
    %1 = arith.extui %0 : i1 to i32
    %c0_i32_0 = arith.constant 0 : i32
    %2 = arith.cmpi ne, %1, %c0_i32_0 : i32
    scf.if %2 {
      %cst_10 = arith.constant 0.000000e+00 : f32
      %13 = vector.broadcast %cst_10 : f32 to vector<16x32xf32>
      %c0_11 = arith.constant 0 : index
      %c0_12 = arith.constant 0 : index
      %14 = vector.load %arg11[%c0_11, %c0_12] : memref<16x32xf32, #tpu.memory_space<vmem>>, vector<16x32xf32>
      tpu.vector_store %arg11[%c0_11, %c0_12], %13 {strides = array<i32>} : memref<16x32xf32, #tpu.memory_space<vmem>>, vector<16x32xf32>,
    } else {
    }
    %c0 = arith.constant 0 : index
    %c0_1 = arith.constant 0 : index
    %3 = vector.load %arg11[%c0, %c0_1] : memref<16x32xf32, #tpu.memory_space<vmem>>, vector<16x32xf32>
    %c0_2 = arith.constant 0 : index
    %c0_3 = arith.constant 0 : index
    %4 = vector.load %arg2[%c0_2, %c0_3] : memref<16x1024xf32, #tpu.memory_space<vmem>>, vector<16x1024xf32>
    %5 = arith.truncf %4 : vector<16x1024xf32> to vector<16x1024xbf16>
    %c0_4 = arith.constant 0 : index
    %c0_5 = arith.constant 0 : index
    %6 = vector.load %arg3[%c0_4, %c0_5] : memref<1024x32xbf16, #tpu.memory_space<vmem>>, vector<1024x32xbf16>
    %cst = arith.constant dense<0.000000e+00> : vector<16x32xf32>
    %7 = tpu.matmul %5, %6, %cst {dimension_numbers = #tpu.dot_dimension_numbers<[1], [0], [0], [1], [0, 0, 1, 1], [], []>} : vector<16x1024xbf16>, vector<1024x32xbf16>, vector<16x32xf32> -> vector<16x32xf32>
    %8 = arith.addf %3, %7 : vector<16x32xf32>
    %c0_6 = arith.constant 0 : index
    %c0_7 = arith.constant 0 : index
    %9 = vector.load %arg11[%c0_6, %c0_7] : memref<16x32xf32, #tpu.memory_space<vmem>>, vector<16x32xf32>
    tpu.vector_store %arg11[%c0_6, %c0_7], %8 {strides = array<i32>} : memref<16x32xf32, #tpu.memory_space<vmem>>, vector<16x32xf32>,
    %c0_i32_8 = arith.constant 0 : i32
    %10 = arith.cmpi eq, %arg1, %c0_i32_8 : i32
    %11 = arith.extui %10 : i1 to i32
    %c0_i32_9 = arith.constant 0 : i32
    %12 = arith.cmpi ne, %11, %c0_i32_9 : i32
    scf.if %12 {
      %c0_10 = arith.constant 0 : index
      %c0_11 = arith.constant 0 : index
      %13 = vector.load %arg11[%c0_10, %c0_11] : memref<16x32xf32, #tpu.memory_space<vmem>>, vector<16x32xf32>
      %c0_12 = arith.constant 0 : index
      %c0_13 = arith.constant 0 : index
      %14 = vector.load %arg4[%c0_12, %c0_13] : memref<1x32xf32, #tpu.memory_space<vmem>>, vector<1x32xf32>
      %15 = vector.broadcast %14 : vector<1x32xf32> to vector<16x32xf32>
      %16 = arith.addf %13, %15 : vector<16x32xf32>
      %cst_14 = arith.constant 0.000000e+00 : f32
      %17 = vector.broadcast %cst_14 : f32 to vector<16x32xf32>
      %18 = arith.maximumf %16, %17 : vector<16x32xf32>
      %c0_15 = arith.constant 0 : index
      %c0_16 = arith.constant 0 : index
      %19 = vector.load %arg5[%c0_15, %c0_16] : memref<32x32xf32, #tpu.memory_space<vmem>>, vector<32x32xf32>
      %cst_17 = arith.constant dense<0.000000e+00> : vector<16x32xf32>
      %20 = tpu.matmul %18, %19, %cst_17 {dimension_numbers = #tpu.dot_dimension_numbers<[1], [0], [0], [1], [0, 0, 1, 1], [], []>} : vector<16x32xf32>, vector<32x32xf32>, vector<16x32xf32> -> vector<16x32xf32>
      %c0_18 = arith.constant 0 : index
      %c0_19 = arith.constant 0 : index
      %21 = vector.load %arg6[%c0_18, %c0_19] : memref<1x32xf32, #tpu.memory_space<vmem>>, vector<1x32xf32>
      %22 = vector.broadcast %21 : vector<1x32xf32> to vector<16x32xf32>
      %23 = arith.addf %20, %22 : vector<16x32xf32>
      %c0_20 = arith.constant 0 : index
      %c0_21 = arith.constant 0 : index
      %24 = vector.load %arg9[%c0_20, %c0_21] : memref<16x32xf32, #tpu.memory_space<vmem>>, vector<16x32xf32>
      tpu.vector_store %arg9[%c0_20, %c0_21], %23 {strides = array<i32>} : memref<16x32xf32, #tpu.memory_space<vmem>>, vector<16x32xf32>,
      %25 = arith.mulf %23, %23 : vector<16x32xf32>
      %cst_22 = arith.constant dense<0.000000e+00> : vector<16xf32>
      %26 = vector.multi_reduction <add>, %25, %cst_22 [1] : vector<16x32xf32> to vector<16xf32>
      %27 = vector.shape_cast %26 : vector<16xf32> to vector<16x1xf32>
      %c0_23 = arith.constant 0 : index
      %c0_24 = arith.constant 0 : index
      %28 = vector.load %arg7[%c0_23, %c0_24] : memref<32x128xf32, #tpu.memory_space<vmem>>, vector<32x128xf32>
      %cst_25 = arith.constant dense<0.000000e+00> : vector<16x128xf32>
      %29 = tpu.matmul %23, %28, %cst_25 {dimension_numbers = #tpu.dot_dimension_numbers<[1], [0], [0], [1], [0, 0, 1, 1], [], []>} : vector<16x32xf32>, vector<32x128xf32>, vector<16x128xf32> -> vector<16x128xf32>
      %c0_26 = arith.constant 0 : index
      %c0_27 = arith.constant 0 : index
      %30 = vector.load %arg8[%c0_26, %c0_27] : memref<1x128xf32, #tpu.memory_space<vmem>>, vector<1x128xf32>
      %31 = vector.broadcast %27 : vector<16x1xf32> to vector<16x128xf32>
      %32 = vector.broadcast %30 : vector<1x128xf32> to vector<16x128xf32>
      %33 = arith.addf %31, %32 : vector<16x128xf32>
      %cst_28 = arith.constant 2.000000e+00 : f32
      %34 = vector.broadcast %cst_28 : f32 to vector<16x128xf32>
      %35 = arith.mulf %34, %29 : vector<16x128xf32>
      %36 = arith.subf %33, %35 : vector<16x128xf32>
      %cst_29 = arith.constant 0.000000e+00 : f32
      %37 = vector.broadcast %cst_29 : f32 to vector<16x128xf32>
      %38 = arith.maximumf %36, %37 : vector<16x128xf32>
      %39 = math.sqrt %38 : vector<16x128xf32>
      %cst_30 = arith.constant 0.000000e+00 : f32
      %40 = vector.broadcast %cst_30 : f32 to vector<16x128xf32>
      %41 = arith.subf %40, %39 : vector<16x128xf32>
      %c0_31 = arith.constant 0 : index
      %c0_32 = arith.constant 0 : index
      %42 = vector.load %arg10[%c0_31, %c0_32] : memref<16x128xf32, #tpu.memory_space<vmem>>, vector<16x128xf32>
      tpu.vector_store %arg10[%c0_31, %c0_32], %41 {strides = array<i32>} : memref<16x128xf32, #tpu.memory_space<vmem>>, vector<16x128xf32>,
    } else {
    }
    return
  }
  func.func @transform_0(%arg0: i32, %arg1: i32) -> (i32, i32) {
    %c0_i32 = arith.constant 0 : i32
    return %arg0, %arg1 : i32, i32
  }
  func.func @transform_1(%arg0: i32, %arg1: i32) -> (i32, i32) {
    %c0_i32 = arith.constant 0 : i32
    %c0_i32_0 = arith.constant 0 : i32
    return %arg1, %c0_i32 : i32, i32
  }
  func.func @transform_2(%arg0: i32, %arg1: i32) -> (i32, i32) {
    %c0_i32 = arith.constant 0 : i32
    %c0_i32_0 = arith.constant 0 : i32
    %c0_i32_1 = arith.constant 0 : i32
    return %c0_i32, %c0_i32_0 : i32, i32
  }
  func.func @transform_3(%arg0: i32, %arg1: i32) -> (i32, i32) {
    %c0_i32 = arith.constant 0 : i32
    %c0_i32_0 = arith.constant 0 : i32
    %c0_i32_1 = arith.constant 0 : i32
    return %c0_i32, %c0_i32_0 : i32, i32
  }
  func.func @transform_4(%arg0: i32, %arg1: i32) -> (i32, i32) {
    %c0_i32 = arith.constant 0 : i32
    %c0_i32_0 = arith.constant 0 : i32
    %c0_i32_1 = arith.constant 0 : i32
    return %c0_i32, %c0_i32_0 : i32, i32
  }
  func.func @transform_5(%arg0: i32, %arg1: i32) -> (i32, i32) {
    %c0_i32 = arith.constant 0 : i32
    %c0_i32_0 = arith.constant 0 : i32
    %c0_i32_1 = arith.constant 0 : i32
    return %c0_i32, %c0_i32_0 : i32, i32
  }
  func.func @transform_6(%arg0: i32, %arg1: i32) -> (i32, i32) {
    %c0_i32 = arith.constant 0 : i32
    %c0_i32_0 = arith.constant 0 : i32
    %c0_i32_1 = arith.constant 0 : i32
    return %c0_i32, %c0_i32_0 : i32, i32
  }
  func.func @transform_7(%arg0: i32, %arg1: i32) -> (i32, i32) {
    %c0_i32 = arith.constant 0 : i32
    %c0_i32_0 = arith.constant 0 : i32
    return %arg0, %c0_i32 : i32, i32
  }
  func.func @transform_8(%arg0: i32, %arg1: i32) -> (i32, i32) {
    %c0_i32 = arith.constant 0 : i32
    %c0_i32_0 = arith.constant 0 : i32
    return %arg0, %c0_i32 : i32, i32
  }
}

</mosaic_0001>

<llo_original>
// kernel: tpu_custom_call.1
$region0: #{tpu_custom_call.1}
  #allocation0 [shape = 'u32[]', space=smem, size = 0x4, offset = 0x4, fixed_abs, tag = 'smem constant byte address 0x4 - core index']
  #allocation1 [shape = 'u32[144,128]{1,0:T(1,128)}', space=vmem, size = 0x12000, scoped, tag = 'internal scratch']
  #allocation2 [shape = 'f32[16,32]{1,0:T(8,128)}', space=vmem, size = 0x2000, scoped, tag = 'scratch operand']
  %s0 = inlined_call_operand.vmem [shape: f32[2,1024], index: 0, kind: input, shape index: {}]
  %s1 = inlined_call_operand.vmem [shape: bf16[1024,32], index: 1, kind: input, shape index: {}]
  %s2 = inlined_call_operand.vmem [shape: f32[1,32], index: 2, kind: input, shape index: {}]
  %s3 = inlined_call_operand.vmem [shape: f32[32,32], index: 3, kind: input, shape index: {}]
  %s4 = inlined_call_operand.vmem [shape: f32[1,32], index: 4, kind: input, shape index: {}]
  %s5 = inlined_call_operand.vmem [shape: f32[32,128], index: 5, kind: input, shape index: {}]
  %s6 = inlined_call_operand.vmem [shape: f32[1,128], index: 6, kind: input, shape index: {}]
  %s7 = inlined_call_operand.hbm [shape: f32[2,32], index: 7, kind: output, shape index: {0}]
  %s8 = inlined_call_operand.hbm [shape: f32[2,128], index: 8, kind: output, shape index: {1}]
  %9 = xla_tuple %s7, %s8
  %s10 = sld [smem:[#allocation0]]
  $region54: #{tpu_custom_call.1} parent=0
    _
  %s12 = ssub.s32 1, %s10
  %s13 = scalar_select 0, %s12, %s10
  $region1: #{tpu_custom_call.1} parent=0
    #allocation3 [shape = 'u8[8192]{0}', space=vmem, size = 0x2000, scoped, tag = 'output window, operand 0, single buffered']
    #allocation4 [shape = 's32[1]{0}', space=sflag, size = 0x4, scoped, tag = 'scoped memory for tpu_custom_call.1']
    #allocation5 [shape = 'u8[8192]{0}', space=vmem, size = 0x2000, scoped, tag = 'output window, operand 1, single buffered']
    #allocation6 [shape = 's32[1]{0}', space=sflag, size = 0x4, scoped, tag = 'scoped memory for tpu_custom_call.1']
    %14 = vsyncpa [#allocation4], 0
    %15 = vsyncpa [#allocation6], 0
    // Predicated region
    $region2: #{tpu_custom_call.1} parent=1 // pred_check
      _
    $region3: #{tpu_custom_call.1} parent=1 // pred_check_branch
      %17 = sbr.rel (0) target = $region5
    $region4: #{tpu_custom_call.1} parent=1 // pred_region
      _
    $region5: #{tpu_custom_call.1} parent=1 // pred_fallthru
      _
    // Predicated region
    $region6: #{tpu_custom_call.1} parent=1 // pred_check
      _
    $region7: #{tpu_custom_call.1} parent=1 // pred_check_branch
      %19 = sbr.rel (0) target = $region9
    $region8: #{tpu_custom_call.1} parent=1 // pred_region
      _
    $region9: #{tpu_custom_call.1} parent=1 // pred_fallthru
      _
    // Predicated region
    $region10: #{tpu_custom_call.1} parent=1 // pred_check
      _
    $region11: #{tpu_custom_call.1} parent=1 // pred_check_branch
      %21 = sbr.rel (0) target = $region13
    $region12: #{tpu_custom_call.1} parent=1 // pred_region
      _
    $region13: #{tpu_custom_call.1} parent=1 // pred_fallthru
      _
    // Predicated region
    $region14: #{tpu_custom_call.1} parent=1 // pred_check
      _
    $region15: #{tpu_custom_call.1} parent=1 // pred_check_branch
      %23 = sbr.rel (0) target = $region17
    $region16: #{tpu_custom_call.1} parent=1 // pred_region
      _
    $region17: #{tpu_custom_call.1} parent=1 // pred_fallthru
      _
    // Predicated region
    $region18: #{tpu_custom_call.1} parent=1 // pred_check
      _
    $region19: #{tpu_custom_call.1} parent=1 // pred_check_branch
      %25 = sbr.rel (0) target = $region21
    $region20: #{tpu_custom_call.1} parent=1 // pred_region
      _
    $region21: #{tpu_custom_call.1} parent=1 // pred_fallthru
      _
    // Predicated region
    $region22: #{tpu_custom_call.1} parent=1 // pred_check
      _
    $region23: #{tpu_custom_call.1} parent=1 // pred_check_branch
      %27 = sbr.rel (0) target = $region25
    $region24: #{tpu_custom_call.1} parent=1 // pred_region
      _
    $region25: #{tpu_custom_call.1} parent=1 // pred_fallthru
      _
    // Predicated region
    $region26: #{tpu_custom_call.1} parent=1 // pred_check
      _
    $region27: #{tpu_custom_call.1} parent=1 // pred_check_branch
      %29 = sbr.rel (0) target = $region29
    $region28: #{tpu_custom_call.1} parent=1 // pred_region
      _
    $region29: #{tpu_custom_call.1} parent=1 // pred_fallthru
      _
    %p31 = scmp.eq.s32.totalorder 0, 0
    // Predicated region
    $region30: #{tpu_custom_call.1} parent=1 // pred_check
      %p32 = pneg %p31
    $region31: #{tpu_custom_call.1} parent=1 // pred_check_branch
      %34 = sbr.rel (%p32) target = $region33
    $region32: #{tpu_custom_call.1} parent=1 // pred_region
      %vm35 = vcmask 261120
      %36 = vst.msk [vmem:[#allocation2] sm:$0xff] %vm35, 0.0
      %37 = vst.msk [vmem:[#allocation2 + $0x8] sm:$0xff] %vm35, 0.0
    $region33: #{tpu_custom_call.1} parent=1 // pred_fallthru
      _
    %v38 = vld [vmem:[#allocation2] sm:$0xff]
    %v39 = vld [vmem:[#allocation2 + $0x8] sm:$0xff]
    %v40 = vld [vmem:[%s0] sm:$0xff]
    %v41 = vld [vmem:[%s0 + $0x8] sm:$0xff]
    %v42 = vld [vmem:[%s0 + $0x10] sm:$0xff]
    %v43 = vld [vmem:[%s0 + $0x18] sm:$0xff]
    %v44 = vld [vmem:[%s0 + $0x20] sm:$0xff]
    %v45 = vld [vmem:[%s0 + $0x28] sm:$0xff]
    %v46 = vld [vmem:[%s0 + $0x30] sm:$0xff]
    %v47 = vld [vmem:[%s0 + $0x38] sm:$0xff]
    %v48 = vld [vmem:[%s0 + $0x40] sm:$0xff]
    %v49 = vld [vmem:[%s0 + $0x48] sm:$0xff]
    %v50 = vld [vmem:[%s0 + $0x50] sm:$0xff]
    %v51 = vld [vmem:[%s0 + $0x58] sm:$0xff]
    %v52 = vld [vmem:[%s0 + $0x60] sm:$0xff]
    %v53 = vld [vmem:[%s0 + $0x68] sm:$0xff]
    %v54 = vld [vmem:[%s0 + $0x70] sm:$0xff]
    %v55 = vld [vmem:[%s0 + $0x78] sm:$0xff]
    %v72 = vcombine.low %v40, %v42
    %v73 = vcombine.high %v40, %v42
    %v74 = vcombine.low %v44, %v46
    %v75 = vcombine.high %v44, %v46
    %v77 = vunpack.c.l.s4 1983009808
    %v78 = vunpack.c.0.s8 %v77
    %v79 = vlaneseq
    %v80 = vshrl.u32 %v79, 7
    %v81 = vsub.s32 %v78, %v80
    %v82 = vrot.slane %v72, %v81
    %v84 = vunpack.c.l.s4 1983009808
    %v85 = vunpack.c.0.s8 %v84
    %v86 = vlaneseq
    %v87 = vshrl.u32 %v86, 7
    %v88 = vsub.s32 %v85, %v87
    %v89 = vrot.slane %v73, %v88
    %v91 = vunpack.c.l.s4 1983009808
    %v92 = vunpack.c.0.s8 %v91
    %v93 = vlaneseq
    %v94 = vshrl.u32 %v93, 7
    %v95 = vsub.s32 %v92, %v94
    %v96 = vrot.slane %v74, %v95
    %v98 = vunpack.c.l.s4 1983009808
    %v99 = vunpack.c.0.s8 %v98
    %v100 = vlaneseq
    %v101 = vshrl.u32 %v100, 7
    %v102 = vsub.s32 %v99, %v101
    %v103 = vrot.slane %v75, %v102
    %v104 = vcombine.low %v82, %v96
    %v105 = vcombine.high %v82, %v96
    %v106 = vcombine.low %v89, %v103
    %v107 = vcombine.high %v89, %v103
    %v108 = vcombine.low %v41, %v43
    %v109 = vcombine.high %v41, %v43
    %v110 = vcombine.low %v45, %v47
    %v111 = vcombine.high %v45, %v47
    %v113 = vunpack.c.l.s4 1983009808
    %v114 = vunpack.c.0.s8 %v113
    %v115 = vlaneseq
    %v116 = vshrl.u32 %v115, 7
    %v117 = vsub.s32 %v114, %v116
    %v118 = vrot.slane %v108, %v117
    %v120 = vunpack.c.l.s4 1983009808
    %v121 = vunpack.c.0.s8 %v120
    %v122 = vlaneseq
    %v123 = vshrl.u32 %v122, 7
    %v124 = vsub.s32 %v121, %v123
    %v125 = vrot.slane %v109, %v124
    %v127 = vunpack.c.l.s4 1983009808
    %v128 = vunpack.c.0.s8 %v127
    %v129 = vlaneseq
    %v130 = vshrl.u32 %v129, 7
    %v131 = vsub.s32 %v128, %v130
    %v132 = vrot.slane %v110, %v131
    %v134 = vunpack.c.l.s4 1983009808
    %v135 = vunpack.c.0.s8 %v134
    %v136 = vlaneseq
    %v137 = vshrl.u32 %v136, 7
    %v138 = vsub.s32 %v135, %v137
    %v139 = vrot.slane %v111, %v138
    %v140 = vcombine.low %v118, %v132
    %v141 = vcombine.high %v118, %v132
    %v142 = vcombine.low %v125, %v139
    %v143 = vcombine.high %v125, %v139
    %v144 = vcombine.low %v48, %v50
    %v145 = vcombine.high %v48, %v50
    %v146 = vcombine.low %v52, %v54
    %v147 = vcombine.high %v52, %v54
    %v149 = vunpack.c.l.s4 1983009808
    %v150 = vunpack.c.0.s8 %v149
    %v151 = vlaneseq
    %v152 = vshrl.u32 %v151, 7
    %v153 = vsub.s32 %v150, %v152
    %v154 = vrot.slane %v144, %v153
    %v156 = vunpack.c.l.s4 1983009808
    %v157 = vunpack.c.0.s8 %v156
    %v158 = vlaneseq
    %v159 = vshrl.u32 %v158, 7
    %v160 = vsub.s32 %v157, %v159
    %v161 = vrot.slane %v145, %v160
    %v163 = vunpack.c.l.s4 1983009808
    %v164 = vunpack.c.0.s8 %v163
    %v165 = vlaneseq
    %v166 = vshrl.u32 %v165, 7
    %v167 = vsub.s32 %v164, %v166
    %v168 = vrot.slane %v146, %v167
    %v170 = vunpack.c.l.s4 1983009808
    %v171 = vunpack.c.0.s8 %v170
    %v172 = vlaneseq
    %v173 = vshrl.u32 %v172, 7
    %v174 = vsub.s32 %v171, %v173
    %v175 = vrot.slane %v147, %v174
    %v176 = vcombine.low %v154, %v168
    %v177 = vcombine.high %v154, %v168
    %v178 = vcombine.low %v161, %v175
    %v179 = vcombine.high %v161, %v175
    %v180 = vcombine.low %v49, %v51
    %v181 = vcombine.high %v49, %v51
    %v182 = vcombine.low %v53, %v55
    %v183 = vcombine.high %v53, %v55
    %v185 = vunpack.c.l.s4 1983009808
    %v186 = vunpack.c.0.s8 %v185
    %v187 = vlaneseq
    %v188 = vshrl.u32 %v187, 7
    %v189 = vsub.s32 %v186, %v188
    %v190 = vrot.slane %v180, %v189
    %v192 = vunpack.c.l.s4 1983009808
    %v193 = vunpack.c.0.s8 %v192
    %v194 = vlaneseq
    %v195 = vshrl.u32 %v194, 7
    %v196 = vsub.s32 %v193, %v195
    %v197 = vrot.slane %v181, %v196
    %v199 = vunpack.c.l.s4 1983009808
    %v200 = vunpack.c.0.s8 %v199
    %v201 = vlaneseq
    %v202 = vshrl.u32 %v201, 7
    %v203 = vsub.s32 %v200, %v202
    %v204 = vrot.slane %v182, %v203
    %v206 = vunpack.c.l.s4 1983009808
    %v207 = vunpack.c.0.s8 %v206
    %v208 = vlaneseq
    %v209 = vshrl.u32 %v208, 7
    %v210 = vsub.s32 %v207, %v209
    %v211 = vrot.slane %v183, %v210
    %v212 = vcombine.low %v190, %v204
    %v213 = vcombine.high %v190, %v204
    %v214 = vcombine.low %v197, %v211
    %v215 = vcombine.high %v197, %v211
    %v232 = vpack.c.bf16 %v176, %v104
    %v233 = vpack.c.bf16 %v177, %v105
    %v234 = vpack.c.bf16 %v178, %v106
    %v235 = vpack.c.bf16 %v179, %v107
    %v236 = vpack.c.bf16 %v212, %v140
    %v237 = vpack.c.bf16 %v213, %v141
    %v238 = vpack.c.bf16 %v214, %v142
    %v239 = vpack.c.bf16 %v215, %v143
    %v240 = vld [vmem:[%s1] sm:$0xf]
    %v241 = vld [vmem:[%s1 + $0x4] sm:$0xf]
    %v242 = vld [vmem:[%s1 + $0x8] sm:$0xf]
    %v243 = vld [vmem:[%s1 + $0xc] sm:$0xf]
    %v244 = vld [vmem:[%s1 + $0x10] sm:$0xf]
    %v245 = vld [vmem:[%s1 + $0x14] sm:$0xf]
    %v246 = vld [vmem:[%s1 + $0x18] sm:$0xf]
    %v247 = vld [vmem:[%s1 + $0x1c] sm:$0xf]
    %v248 = vld [vmem:[%s1 + $0x20] sm:$0xf]
    %v249 = vld [vmem:[%s1 + $0x24] sm:$0xf]
    %v250 = vld [vmem:[%s1 + $0x28] sm:$0xf]
    %v251 = vld [vmem:[%s1 + $0x2c] sm:$0xf]
    %v252 = vld [vmem:[%s1 + $0x30] sm:$0xf]
    %v253 = vld [vmem:[%s1 + $0x34] sm:$0xf]
    %v254 = vld [vmem:[%s1 + $0x38] sm:$0xf]
    %v255 = vld [vmem:[%s1 + $0x3c] sm:$0xf]
    %v256 = vld [vmem:[%s1 + $0x40] sm:$0xf]
    %v257 = vld [vmem:[%s1 + $0x44] sm:$0xf]
    %v258 = vld [vmem:[%s1 + $0x48] sm:$0xf]
    %v259 = vld [vmem:[%s1 + $0x4c] sm:$0xf]
    %v260 = vld [vmem:[%s1 + $0x50] sm:$0xf]
    %v261 = vld [vmem:[%s1 + $0x54] sm:$0xf]
    %v262 = vld [vmem:[%s1 + $0x58] sm:$0xf]
    %v263 = vld [vmem:[%s1 + $0x5c] sm:$0xf]
    %v264 = vld [vmem:[%s1 + $0x60] sm:$0xf]
    %v265 = vld [vmem:[%s1 + $0x64] sm:$0xf]
    %v266 = vld [vmem:[%s1 + $0x68] sm:$0xf]
    %v267 = vld [vmem:[%s1 + $0x6c] sm:$0xf]
    %v268 = vld [vmem:[%s1 + $0x70] sm:$0xf]
    %v269 = vld [vmem:[%s1 + $0x74] sm:$0xf]
    %v270 = vld [vmem:[%s1 + $0x78] sm:$0xf]
    %v271 = vld [vmem:[%s1 + $0x7c] sm:$0xf]
    %v272 = vld [vmem:[%s1 + $0x80] sm:$0xf]
    %v273 = vld [vmem:[%s1 + $0x84] sm:$0xf]
    %v274 = vld [vmem:[%s1 + $0x88] sm:$0xf]
    %v275 = vld [vmem:[%s1 + $0x8c] sm:$0xf]
    %v276 = vld [vmem:[%s1 + $0x90] sm:$0xf]
    %v277 = vld [vmem:[%s1 + $0x94] sm:$0xf]
    %v278 = vld [vmem:[%s1 + $0x98] sm:$0xf]
    %v279 = vld [vmem:[%s1 + $0x9c] sm:$0xf]
    %v280 = vld [vmem:[%s1 + $0xa0] sm:$0xf]
    %v281 = vld [vmem:[%s1 + $0xa4] sm:$0xf]
    %v282 = vld [vmem:[%s1 + $0xa8] sm:$0xf]
    %v283 = vld [vmem:[%s1 + $0xac] sm:$0xf]
    %v284 = vld [vmem:[%s1 + $0xb0] sm:$0xf]
    %v285 = vld [vmem:[%s1 + $0xb4] sm:$0xf]
    %v286 = vld [vmem:[%s1 + $0xb8] sm:$0xf]
    %v287 = vld [vmem:[%s1 + $0xbc] sm:$0xf]
    %v288 = vld [vmem:[%s1 + $0xc0] sm:$0xf]
    %v289 = vld [vmem:[%s1 + $0xc4] sm:$0xf]
    %v290 = vld [vmem:[%s1 + $0xc8] sm:$0xf]
    %v291 = vld [vmem:[%s1 + $0xcc] sm:$0xf]
    %v292 = vld [vmem:[%s1 + $0xd0] sm:$0xf]
    %v293 = vld [vmem:[%s1 + $0xd4] sm:$0xf]
    %v294 = vld [vmem:[%s1 + $0xd8] sm:$0xf]
    %v295 = vld [vmem:[%s1 + $0xdc] sm:$0xf]
    %v296 = vld [vmem:[%s1 + $0xe0] sm:$0xf]
    %v297 = vld [vmem:[%s1 + $0xe4] sm:$0xf]
    %v298 = vld [vmem:[%s1 + $0xe8] sm:$0xf]
    %v299 = vld [vmem:[%s1 + $0xec] sm:$0xf]
    %v300 = vld [vmem:[%s1 + $0xf0] sm:$0xf]
    %v301 = vld [vmem:[%s1 + $0xf4] sm:$0xf]
    %v302 = vld [vmem:[%s1 + $0xf8] sm:$0xf]
    %v303 = vld [vmem:[%s1 + $0xfc] sm:$0xf]
    %v304 = vld [vmem:[%s1 + $0x100] sm:$0xf]
    %v305 = vld [vmem:[%s1 + $0x104] sm:$0xf]
    %v306 = vld [vmem:[%s1 + $0x108] sm:$0xf]
    %v307 = vld [vmem:[%s1 + $0x10c] sm:$0xf]
    %v308 = vld [vmem:[%s1 + $0x110] sm:$0xf]
    %v309 = vld [vmem:[%s1 + $0x114] sm:$0xf]
    %v310 = vld [vmem:[%s1 + $0x118] sm:$0xf]
    %v311 = vld [vmem:[%s1 + $0x11c] sm:$0xf]
    %v312 = vld [vmem:[%s1 + $0x120] sm:$0xf]
    %v313 = vld [vmem:[%s1 + $0x124] sm:$0xf]
    %v314 = vld [vmem:[%s1 + $0x128] sm:$0xf]
    %v315 = vld [vmem:[%s1 + $0x12c] sm:$0xf]
    %v316 = vld [vmem:[%s1 + $0x130] sm:$0xf]
    %v317 = vld [vmem:[%s1 + $0x134] sm:$0xf]
    %v318 = vld [vmem:[%s1 + $0x138] sm:$0xf]
    %v319 = vld [vmem:[%s1 + $0x13c] sm:$0xf]
    %v320 = vld [vmem:[%s1 + $0x140] sm:$0xf]
    %v321 = vld [vmem:[%s1 + $0x144] sm:$0xf]
    %v322 = vld [vmem:[%s1 + $0x148] sm:$0xf]
    %v323 = vld [vmem:[%s1 + $0x14c] sm:$0xf]
    %v324 = vld [vmem:[%s1 + $0x150] sm:$0xf]
    %v325 = vld [vmem:[%s1 + $0x154] sm:$0xf]
    %v326 = vld [vmem:[%s1 + $0x158] sm:$0xf]
    %v327 = vld [vmem:[%s1 + $0x15c] sm:$0xf]
    %v328 = vld [vmem:[%s1 + $0x160] sm:$0xf]
    %v329 = vld [vmem:[%s1 + $0x164] sm:$0xf]
    %v330 = vld [vmem:[%s1 + $0x168] sm:$0xf]
    %v331 = vld [vmem:[%s1 + $0x16c] sm:$0xf]
    %v332 = vld [vmem:[%s1 + $0x170] sm:$0xf]
    %v333 = vld [vmem:[%s1 + $0x174] sm:$0xf]
    %v334 = vld [vmem:[%s1 + $0x178] sm:$0xf]
    %v335 = vld [vmem:[%s1 + $0x17c] sm:$0xf]
    %v336 = vld [vmem:[%s1 + $0x180] sm:$0xf]
    %v337 = vld [vmem:[%s1 + $0x184] sm:$0xf]
    %v338 = vld [vmem:[%s1 + $0x188] sm:$0xf]
    %v339 = vld [vmem:[%s1 + $0x18c] sm:$0xf]
    %v340 = vld [vmem:[%s1 + $0x190] sm:$0xf]
    %v341 = vld [vmem:[%s1 + $0x194] sm:$0xf]
    %v342 = vld [vmem:[%s1 + $0x198] sm:$0xf]
    %v343 = vld [vmem:[%s1 + $0x19c] sm:$0xf]
    %v344 = vld [vmem:[%s1 + $0x1a0] sm:$0xf]
    %v345 = vld [vmem:[%s1 + $0x1a4] sm:$0xf]
    %v346 = vld [vmem:[%s1 + $0x1a8] sm:$0xf]
    %v347 = vld [vmem:[%s1 + $0x1ac] sm:$0xf]
    %v348 = vld [vmem:[%s1 + $0x1b0] sm:$0xf]
    %v349 = vld [vmem:[%s1 + $0x1b4] sm:$0xf]
    %v350 = vld [vmem:[%s1 + $0x1b8] sm:$0xf]
    %v351 = vld [vmem:[%s1 + $0x1bc] sm:$0xf]
    %v352 = vld [vmem:[%s1 + $0x1c0] sm:$0xf]
    %v353 = vld [vmem:[%s1 + $0x1c4] sm:$0xf]
    %v354 = vld [vmem:[%s1 + $0x1c8] sm:$0xf]
    %v355 = vld [vmem:[%s1 + $0x1cc] sm:$0xf]
    %v356 = vld [vmem:[%s1 + $0x1d0] sm:$0xf]
    %v357 = vld [vmem:[%s1 + $0x1d4] sm:$0xf]
    %v358 = vld [vmem:[%s1 + $0x1d8] sm:$0xf]
    %v359 = vld [vmem:[%s1 + $0x1dc] sm:$0xf]
    %v360 = vld [vmem:[%s1 + $0x1e0] sm:$0xf]
    %v361 = vld [vmem:[%s1 + $0x1e4] sm:$0xf]
    %v362 = vld [vmem:[%s1 + $0x1e8] sm:$0xf]
    %v363 = vld [vmem:[%s1 + $0x1ec] sm:$0xf]
    %v364 = vld [vmem:[%s1 + $0x1f0] sm:$0xf]
    %v365 = vld [vmem:[%s1 + $0x1f4] sm:$0xf]
    %v366 = vld [vmem:[%s1 + $0x1f8] sm:$0xf]
    %v367 = vld [vmem:[%s1 + $0x1fc] sm:$0xf]
    %v496 = vunpack.c.l.b16 %v240
    %v497 = vunpack.c.l.b16 %v241
    %v498 = vunpack.c.l.b16 %v242
    %v499 = vunpack.c.l.b16 %v243
    %v500 = vunpack.c.l.b16 %v244
    %v501 = vunpack.c.l.b16 %v245
    %v502 = vunpack.c.l.b16 %v246
    %v503 = vunpack.c.l.b16 %v247
    %v504 = vunpack.c.l.b16 %v248
    %v505 = vunpack.c.l.b16 %v249
    %v506 = vunpack.c.l.b16 %v250
    %v507 = vunpack.c.l.b16 %v251
    %v508 = vunpack.c.l.b16 %v252
    %v509 = vunpack.c.l.b16 %v253
    %v510 = vunpack.c.l.b16 %v254
    %v511 = vunpack.c.l.b16 %v255
    %v512 = vunpack.c.l.b16 %v256
    %v513 = vunpack.c.l.b16 %v257
    %v514 = vunpack.c.l.b16 %v258
    %v515 = vunpack.c.l.b16 %v259
    %v516 = vunpack.c.l.b16 %v260
    %v517 = vunpack.c.l.b16 %v261
    %v518 = vunpack.c.l.b16 %v262
    %v519 = vunpack.c.l.b16 %v263
    %v520 = vunpack.c.l.b16 %v264
    %v521 = vunpack.c.l.b16 %v265
    %v522 = vunpack.c.l.b16 %v266
    %v523 = vunpack.c.l.b16 %v267
    %v524 = vunpack.c.l.b16 %v268
    %v525 = vunpack.c.l.b16 %v269
    %v526 = vunpack.c.l.b16 %v270
    %v527 = vunpack.c.l.b16 %v271
    %v528 = vunpack.c.l.b16 %v272
    %v529 = vunpack.c.l.b16 %v273
    %v530 = vunpack.c.l.b16 %v274
    %v531 = vunpack.c.l.b16 %v275
    %v532 = vunpack.c.l.b16 %v276
    %v533 = vunpack.c.l.b16 %v277
    %v534 = vunpack.c.l.b16 %v278
    %v535 = vunpack.c.l.b16 %v279
    %v536 = vunpack.c.l.b16 %v280
    %v537 = vunpack.c.l.b16 %v281
    %v538 = vunpack.c.l.b16 %v282
    %v539 = vunpack.c.l.b16 %v283
    %v540 = vunpack.c.l.b16 %v284
    %v541 = vunpack.c.l.b16 %v285
    %v542 = vunpack.c.l.b16 %v286
    %v543 = vunpack.c.l.b16 %v287
    %v544 = vunpack.c.l.b16 %v288
    %v545 = vunpack.c.l.b16 %v289
    %v546 = vunpack.c.l.b16 %v290
    %v547 = vunpack.c.l.b16 %v291
    %v548 = vunpack.c.l.b16 %v292
    %v549 = vunpack.c.l.b16 %v293
    %v550 = vunpack.c.l.b16 %v294
    %v551 = vunpack.c.l.b16 %v295
    %v552 = vunpack.c.l.b16 %v296
    %v553 = vunpack.c.l.b16 %v297
    %v554 = vunpack.c.l.b16 %v298
    %v555 = vunpack.c.l.b16 %v299
    %v556 = vunpack.c.l.b16 %v300
    %v557 = vunpack.c.l.b16 %v301
    %v558 = vunpack.c.l.b16 %v302
    %v559 = vunpack.c.l.b16 %v303
    %v560 = vunpack.c.l.b16 %v304
    %v561 = vunpack.c.l.b16 %v305
    %v562 = vunpack.c.l.b16 %v306
    %v563 = vunpack.c.l.b16 %v307
    %v564 = vunpack.c.l.b16 %v308
    %v565 = vunpack.c.l.b16 %v309
    %v566 = vunpack.c.l.b16 %v310
    %v567 = vunpack.c.l.b16 %v311
    %v568 = vunpack.c.l.b16 %v312
    %v569 = vunpack.c.l.b16 %v313
    %v570 = vunpack.c.l.b16 %v314
    %v571 = vunpack.c.l.b16 %v315
    %v572 = vunpack.c.l.b16 %v316
    %v573 = vunpack.c.l.b16 %v317
    %v574 = vunpack.c.l.b16 %v318
    %v575 = vunpack.c.l.b16 %v319
    %v576 = vunpack.c.l.b16 %v320
    %v577 = vunpack.c.l.b16 %v321
    %v578 = vunpack.c.l.b16 %v322
    %v579 = vunpack.c.l.b16 %v323
    %v580 = vunpack.c.l.b16 %v324
    %v581 = vunpack.c.l.b16 %v325
    %v582 = vunpack.c.l.b16 %v326
    %v583 = vunpack.c.l.b16 %v327
    %v584 = vunpack.c.l.b16 %v328
    %v585 = vunpack.c.l.b16 %v329
    %v586 = vunpack.c.l.b16 %v330
    %v587 = vunpack.c.l.b16 %v331
    %v588 = vunpack.c.l.b16 %v332
    %v589 = vunpack.c.l.b16 %v333
    %v590 = vunpack.c.l.b16 %v334
    %v591 = vunpack.c.l.b16 %v335
    %v592 = vunpack.c.l.b16 %v336
    %v593 = vunpack.c.l.b16 %v337
    %v594 = vunpack.c.l.b16 %v338
    %v595 = vunpack.c.l.b16 %v339
    %v596 = vunpack.c.l.b16 %v340
    %v597 = vunpack.c.l.b16 %v341
    %v598 = vunpack.c.l.b16 %v342
    %v599 = vunpack.c.l.b16 %v343
    %v600 = vunpack.c.l.b16 %v344
    %v601 = vunpack.c.l.b16 %v345
    %v602 = vunpack.c.l.b16 %v346
    %v603 = vunpack.c.l.b16 %v347
    %v604 = vunpack.c.l.b16 %v348
    %v605 = vunpack.c.l.b16 %v349
    %v606 = vunpack.c.l.b16 %v350
    %v607 = vunpack.c.l.b16 %v351
    %v608 = vunpack.c.l.b16 %v352
    %v609 = vunpack.c.l.b16 %v353
    %v610 = vunpack.c.l.b16 %v354
    %v611 = vunpack.c.l.b16 %v355
    %v612 = vunpack.c.l.b16 %v356
    %v613 = vunpack.c.l.b16 %v357
    %v614 = vunpack.c.l.b16 %v358
    %v615 = vunpack.c.l.b16 %v359
    %v616 = vunpack.c.l.b16 %v360
    %v617 = vunpack.c.l.b16 %v361
    %v618 = vunpack.c.l.b16 %v362
    %v619 = vunpack.c.l.b16 %v363
    %v620 = vunpack.c.l.b16 %v364
    %v621 = vunpack.c.l.b16 %v365
    %v622 = vunpack.c.l.b16 %v366
    %v623 = vunpack.c.l.b16 %v367
    %v624 = vpack.c.b16 %v497, %v496
    %v625 = vpack.c.b16 %v499, %v498
    %v626 = vpack.c.b16 %v501, %v500
    %v627 = vpack.c.b16 %v503, %v502
    %v628 = vpack.c.b16 %v505, %v504
    %v629 = vpack.c.b16 %v507, %v506
    %v630 = vpack.c.b16 %v509, %v508
    %v631 = vpack.c.b16 %v511, %v510
    %v632 = vpack.c.b16 %v513, %v512
    %v633 = vpack.c.b16 %v515, %v514
    %v634 = vpack.c.b16 %v517, %v516
    %v635 = vpack.c.b16 %v519, %v518
    %v636 = vpack.c.b16 %v521, %v520
    %v637 = vpack.c.b16 %v523, %v522
    %v638 = vpack.c.b16 %v525, %v524
    %v639 = vpack.c.b16 %v527, %v526
    %v640 = vpack.c.b16 %v529, %v528
    %v641 = vpack.c.b16 %v531, %v530
    %v642 = vpack.c.b16 %v533, %v532
    %v643 = vpack.c.b16 %v535, %v534
    %v644 = vpack.c.b16 %v537, %v536
    %v645 = vpack.c.b16 %v539, %v538
    %v646 = vpack.c.b16 %v541, %v540
    %v647 = vpack.c.b16 %v543, %v542
    %v648 = vpack.c.b16 %v545, %v544
    %v649 = vpack.c.b16 %v547, %v546
    %v650 = vpack.c.b16 %v549, %v548
    %v651 = vpack.c.b16 %v551, %v550
    %v652 = vpack.c.b16 %v553, %v552
    %v653 = vpack.c.b16 %v555, %v554
    %v654 = vpack.c.b16 %v557, %v556
    %v655 = vpack.c.b16 %v559, %v558
    %v656 = vpack.c.b16 %v561, %v560
    %v657 = vpack.c.b16 %v563, %v562
    %v658 = vpack.c.b16 %v565, %v564
    %v659 = vpack.c.b16 %v567, %v566
    %v660 = vpack.c.b16 %v569, %v568
    %v661 = vpack.c.b16 %v571, %v570
    %v662 = vpack.c.b16 %v573, %v572
    %v663 = vpack.c.b16 %v575, %v574
    %v664 = vpack.c.b16 %v577, %v576
    %v665 = vpack.c.b16 %v579, %v578
    %v666 = vpack.c.b16 %v581, %v580
    %v667 = vpack.c.b16 %v583, %v582
    %v668 = vpack.c.b16 %v585, %v584
    %v669 = vpack.c.b16 %v587, %v586
    %v670 = vpack.c.b16 %v589, %v588
    %v671 = vpack.c.b16 %v591, %v590
    %v672 = vpack.c.b16 %v593, %v592
    %v673 = vpack.c.b16 %v595, %v594
    %v674 = vpack.c.b16 %v597, %v596
    %v675 = vpack.c.b16 %v599, %v598
    %v676 = vpack.c.b16 %v601, %v600
    %v677 = vpack.c.b16 %v603, %v602
    %v678 = vpack.c.b16 %v605, %v604
    %v679 = vpack.c.b16 %v607, %v606
    %v680 = vpack.c.b16 %v609, %v608
    %v681 = vpack.c.b16 %v611, %v610
    %v682 = vpack.c.b16 %v613, %v612
    %v683 = vpack.c.b16 %v615, %v614
    %v684 = vpack.c.b16 %v617, %v616
    %v685 = vpack.c.b16 %v619, %v618
    %v686 = vpack.c.b16 %v621, %v620
    %v687 = vpack.c.b16 %v623, %v622
    %752 = vmatprep.subr.bf16.mxu0 0
    %753 = vmatpush1.bf16.msra.mxu0 %v631
    %754 = vmatprep.subr.bf16.mxu0 0
    %755 = vmatpush1.bf16.msra.mxu0 %v630
    %756 = vmatprep.subr.bf16.mxu0 0
    %757 = vmatpush1.bf16.msra.mxu0 %v629
    %758 = vmatprep.subr.bf16.mxu0 0
    %759 = vmatpush1.bf16.msra.mxu0 %v628
    %760 = vmatprep.subr.bf16.mxu0 0
    %761 = vmatpush1.bf16.msra.mxu0 %v627
    %762 = vmatprep.subr.bf16.mxu0 0
    %763 = vmatpush1.bf16.msra.mxu0 %v626
    %764 = vmatprep.subr.bf16.mxu0 0
    %765 = vmatpush1.bf16.msra.mxu0 %v625
    %766 = vmatprep.subr.bf16.mxu0 0
    %767 = vmatpush1.bf16.msra.mxu0 %v624
    %768 = vmatprep.subr.bf16.mxu0 0
    %769 = vmatpush2.bf16.msra.mxu0 %v639
    %770 = vmatprep.subr.bf16.mxu0 0
    %771 = vmatpush2.bf16.msra.mxu0 %v638
    %772 = vmatprep.subr.bf16.mxu0 0
    %773 = vmatpush2.bf16.msra.mxu0 %v637
    %774 = vmatprep.subr.bf16.mxu0 0
    %775 = vmatpush2.bf16.msra.mxu0 %v636
    %776 = vmatprep.subr.bf16.mxu0 0
    %777 = vmatpush2.bf16.msra.mxu0 %v635
    %778 = vmatprep.subr.bf16.mxu0 0
    %779 = vmatpush2.bf16.msra.mxu0 %v634
    %780 = vmatprep.subr.bf16.mxu0 0
    %781 = vmatpush2.bf16.msra.mxu0 %v633
    %782 = vmatprep.subr.bf16.mxu0 0
    %783 = vmatpush2.bf16.msra.mxu0 %v632
    %784 = vmatprep.mubr.bf16.mxu0 %v233
    %785 = vmatmul.mubr.bf16.gmra.mxu0 %v232
    %v786 = vpop.f32.mrf.mxu0
    %v787 = vadd.f32 0.0, %v786
    %v788 = vpop.f32.mrf.mxu0
    %v789 = vpop.f32.mrf.mxu0
    %v790 = vadd.f32 0.0, %v789
    %v791 = vpop.f32.mrf.mxu0
    %792 = vdwg.mxu0
    %793 = vmatprep.subr.bf16.mxu0 0
    %794 = vmatpush1.bf16.msra.mxu0 %v647
    %795 = vmatprep.subr.bf16.mxu0 0
    %796 = vmatpush1.bf16.msra.mxu0 %v646
    %797 = vmatprep.subr.bf16.mxu0 0
    %798 = vmatpush1.bf16.msra.mxu0 %v645
    %799 = vmatprep.subr.bf16.mxu0 0
    %800 = vmatpush1.bf16.msra.mxu0 %v644
    %801 = vmatprep.subr.bf16.mxu0 0
    %802 = vmatpush1.bf16.msra.mxu0 %v643
    %803 = vmatprep.subr.bf16.mxu0 0
    %804 = vmatpush1.bf16.msra.mxu0 %v642
    %805 = vmatprep.subr.bf16.mxu0 0
    %806 = vmatpush1.bf16.msra.mxu0 %v641
    %807 = vmatprep.subr.bf16.mxu0 0
    %808 = vmatpush1.bf16.msra.mxu0 %v640
    %809 = vmatprep.subr.bf16.mxu0 0
    %810 = vmatpush2.bf16.msra.mxu0 %v655
    %811 = vmatprep.subr.bf16.mxu0 0
    %812 = vmatpush2.bf16.msra.mxu0 %v654
    %813 = vmatprep.subr.bf16.mxu0 0
    %814 = vmatpush2.bf16.msra.mxu0 %v653
    %815 = vmatprep.subr.bf16.mxu0 0
    %816 = vmatpush2.bf16.msra.mxu0 %v652
    %817 = vmatprep.subr.bf16.mxu0 0
    %818 = vmatpush2.bf16.msra.mxu0 %v651
    %819 = vmatprep.subr.bf16.mxu0 0
    %820 = vmatpush2.bf16.msra.mxu0 %v650
    %821 = vmatprep.subr.bf16.mxu0 0
    %822 = vmatpush2.bf16.msra.mxu0 %v649
    %823 = vmatprep.subr.bf16.mxu0 0
    %824 = vmatpush2.bf16.msra.mxu0 %v648
    %825 = vmatprep.mubr.bf16.mxu0 %v235
    %826 = vmatmul.mubr.bf16.gmra.mxu0 %v234
    %v827 = vpop.f32.mrf.mxu0
    %v828 = vadd.f32 %v787, %v827
    %v829 = vpop.f32.mrf.mxu0
    %v830 = vpop.f32.mrf.mxu0
    %v831 = vadd.f32 %v790, %v830
    %v832 = vpop.f32.mrf.mxu0
    %833 = vdwg.mxu0
    %834 = vmatprep.subr.bf16.mxu0 0
    %835 = vmatpush1.bf16.msra.mxu0 %v663
    %836 = vmatprep.subr.bf16.mxu0 0
    %837 = vmatpush1.bf16.msra.mxu0 %v662
    %838 = vmatprep.subr.bf16.mxu0 0
    %839 = vmatpush1.bf16.msra.mxu0 %v661
    %840 = vmatprep.subr.bf16.mxu0 0
    %841 = vmatpush1.bf16.msra.mxu0 %v660
    %842 = vmatprep.subr.bf16.mxu0 0
    %843 = vmatpush1.bf16.msra.mxu0 %v659
    %844 = vmatprep.subr.bf16.mxu0 0
    %845 = vmatpush1.bf16.msra.mxu0 %v658
    %846 = vmatprep.subr.bf16.mxu0 0
    %847 = vmatpush1.bf16.msra.mxu0 %v657
    %848 = vmatprep.subr.bf16.mxu0 0
    %849 = vmatpush1.bf16.msra.mxu0 %v656
    %850 = vmatprep.subr.bf16.mxu0 0
    %851 = vmatpush2.bf16.msra.mxu0 %v671
    %852 = vmatprep.subr.bf16.mxu0 0
    %853 = vmatpush2.bf16.msra.mxu0 %v670
    %854 = vmatprep.subr.bf16.mxu0 0
    %855 = vmatpush2.bf16.msra.mxu0 %v669
    %856 = vmatprep.subr.bf16.mxu0 0
    %857 = vmatpush2.bf16.msra.mxu0 %v668
    %858 = vmatprep.subr.bf16.mxu0 0
    %859 = vmatpush2.bf16.msra.mxu0 %v667
    %860 = vmatprep.subr.bf16.mxu0 0
    %861 = vmatpush2.bf16.msra.mxu0 %v666
    %862 = vmatprep.subr.bf16.mxu0 0
    %863 = vmatpush2.bf16.msra.mxu0 %v665
    %864 = vmatprep.subr.bf16.mxu0 0
    %865 = vmatpush2.bf16.msra.mxu0 %v664
    %866 = vmatprep.mubr.bf16.mxu0 %v237
    %867 = vmatmul.mubr.bf16.gmra.mxu0 %v236
    %v868 = vpop.f32.mrf.mxu0
    %v869 = vadd.f32 %v828, %v868
    %v870 = vpop.f32.mrf.mxu0
    %v871 = vpop.f32.mrf.mxu0
    %v872 = vadd.f32 %v831, %v871
    %v873 = vpop.f32.mrf.mxu0
    %874 = vdwg.mxu0
    %875 = vmatprep.subr.bf16.mxu0 0
    %876 = vmatpush1.bf16.msra.mxu0 %v679
    %877 = vmatprep.subr.bf16.mxu0 0
    %878 = vmatpush1.bf16.msra.mxu0 %v678
    %879 = vmatprep.subr.bf16.mxu0 0
    %880 = vmatpush1.bf16.msra.mxu0 %v677
    %881 = vmatprep.subr.bf16.mxu0 0
    %882 = vmatpush1.bf16.msra.mxu0 %v676
    %883 = vmatprep.subr.bf16.mxu0 0
    %884 = vmatpush1.bf16.msra.mxu0 %v675
    %885 = vmatprep.subr.bf16.mxu0 0
    %886 = vmatpush1.bf16.msra.mxu0 %v674
    %887 = vmatprep.subr.bf16.mxu0 0
    %888 = vmatpush1.bf16.msra.mxu0 %v673
    %889 = vmatprep.subr.bf16.mxu0 0
    %890 = vmatpush1.bf16.msra.mxu0 %v672
    %891 = vmatprep.subr.bf16.mxu0 0
    %892 = vmatpush2.bf16.msra.mxu0 %v687
    %893 = vmatprep.subr.bf16.mxu0 0
    %894 = vmatpush2.bf16.msra.mxu0 %v686
    %895 = vmatprep.subr.bf16.mxu0 0
    %896 = vmatpush2.bf16.msra.mxu0 %v685
    %897 = vmatprep.subr.bf16.mxu0 0
    %898 = vmatpush2.bf16.msra.mxu0 %v684
    %899 = vmatprep.subr.bf16.mxu0 0
    %900 = vmatpush2.bf16.msra.mxu0 %v683
    %901 = vmatprep.subr.bf16.mxu0 0
    %902 = vmatpush2.bf16.msra.mxu0 %v682
    %903 = vmatprep.subr.bf16.mxu0 0
    %904 = vmatpush2.bf16.msra.mxu0 %v681
    %905 = vmatprep.subr.bf16.mxu0 0
    %906 = vmatpush2.bf16.msra.mxu0 %v680
    %907 = vmatprep.mubr.bf16.mxu0 %v239
    %908 = vmatmul.mubr.bf16.gmra.mxu0 %v238
    %v909 = vpop.f32.mrf.mxu0
    %v910 = vadd.f32 %v869, %v909
    %v911 = vpop.f32.mrf.mxu0
    %v912 = vpop.f32.mrf.mxu0
    %v913 = vadd.f32 %v872, %v912
    %v914 = vpop.f32.mrf.mxu0
    %915 = vdwg.mxu0
    %v916 = vadd.f32 %v38, %v910
    %v917 = vadd.f32 %v39, %v913
    %vm918 = vcmask 261120
    %919 = vst.msk [vmem:[#allocation2] sm:$0xff] %vm918, %v916
    %920 = vst.msk [vmem:[#allocation2 + $0x8] sm:$0xff] %vm918, %v917
    // Predicated region
    $region34: #{tpu_custom_call.1} parent=1 // pred_check
      %p921 = pneg %p31
    $region35: #{tpu_custom_call.1} parent=1 // pred_check_branch
      %923 = sbr.rel (%p921) target = $region37
    $region36: #{tpu_custom_call.1} parent=1 // pred_region
      %v924 = vld [vmem:[#allocation2] sm:$0xff]
      %v925 = vld [vmem:[#allocation2 + $0x8] sm:$0xff]
      %v926 = vld [vmem:[%s2] sm:$0x1]
      %v928 = vlaneseq
      %v929 = vshrl.u32 %v928, 7
      %v930 = vsub.s32 0, %v929
      %v931 = vrot.slane %v926, %v930
      %v933 = vadd.f32 %v924, %v931
      %v934 = vadd.f32 %v925, %v931
      %v935 = vmax.f32 %v933, 0.0
      %v936 = vmax.f32 %v934, 0.0
      %v937 = vld [vmem:[%s3] sm:$0xff]
      %v938 = vld [vmem:[%s3 + $0x8] sm:$0xff]
      %v939 = vld [vmem:[%s3 + $0x10] sm:$0xff]
      %v940 = vld [vmem:[%s3 + $0x18] sm:$0xff]
      %v941 = vld [vmem:[%s4] sm:$0x1]
      %v943 = vlaneseq
      %v944 = vshrl.u32 %v943, 7
      %v945 = vsub.s32 0, %v944
      %v946 = vrot.slane %v941, %v945
      %v949 = vsel %vm918, %v935, 0
      %v952 = vsel %vm918, %v936, 0
      %954 = vmatprep.subr.mxu0 0.0
      %955 = vmatpush1.msra.mxu0 0.0
      %956 = vmatprep.subr.mxu0 0.0
      %957 = vmatpush1.msra.mxu0 0.0
      %958 = vmatprep.subr.mxu0 0.0
      %959 = vmatpush1.msra.mxu0 0.0
      %960 = vmatprep.subr.mxu0 0.0
      %961 = vmatpush1.msra.mxu0 0.0
      %962 = vmatprep.subr.mxu0 0.0
      %963 = vmatpush1.msra.mxu0 0.0
      %964 = vmatprep.subr.mxu0 0.0
      %965 = vmatpush1.msra.mxu0 0.0
      %966 = vmatprep.subr.mxu0 0.0
      %967 = vmatpush1.msra.mxu0 0.0
      %968 = vmatprep.subr.mxu0 0.0
      %969 = vmatpush1.msra.mxu0 0.0
      %970 = vmatprep.subr.mxu0 0.0
      %971 = vmatpush1.msra.mxu0 0.0
      %972 = vmatprep.subr.mxu0 0.0
      %973 = vmatpush1.msra.mxu0 0.0
      %974 = vmatprep.subr.mxu0 0.0
      %975 = vmatpush1.msra.mxu0 0.0
      %976 = vmatprep.subr.mxu0 0.0
      %977 = vmatpush1.msra.mxu0 0.0
      %978 = vmatprep.subr.mxu0 0.0
      %979 = vmatpush1.msra.mxu0 %v940
      %980 = vmatprep.subr.mxu0 0.0
      %981 = vmatpush1.msra.mxu0 %v939
      %982 = vmatprep.subr.mxu0 0.0
      %983 = vmatpush1.msra.mxu0 %v938
      %984 = vmatprep.subr.mxu0 0.0
      %985 = vmatpush1.msra.mxu0 %v937
      %986 = vmatprep.subr.mxu0 0.0
      %987 = vmatpush2.msra.mxu0 0.0
      %988 = vmatprep.subr.mxu0 0.0
      %989 = vmatpush2.msra.mxu0 0.0
      %990 = vmatprep.subr.mxu0 0.0
      %991 = vmatpush2.msra.mxu0 0.0
      %992 = vmatprep.subr.mxu0 0.0
      %993 = vmatpush2.msra.mxu0 0.0
      %994 = vmatprep.subr.mxu0 0.0
      %995 = vmatpush2.msra.mxu0 0.0
      %996 = vmatprep.subr.mxu0 0.0
      %997 = vmatpush2.msra.mxu0 0.0
      %998 = vmatprep.subr.mxu0 0.0
      %999 = vmatpush2.msra.mxu0 0.0
      %1000 = vmatprep.subr.mxu0 0.0
      %1001 = vmatpush2.msra.mxu0 0.0
      %1002 = vmatprep.subr.mxu0 0.0
      %1003 = vmatpush2.msra.mxu0 0.0
      %1004 = vmatprep.subr.mxu0 0.0
      %1005 = vmatpush2.msra.mxu0 0.0
      %1006 = vmatprep.subr.mxu0 0.0
      %1007 = vmatpush2.msra.mxu0 0.0
      %1008 = vmatprep.subr.mxu0 0.0
      %1009 = vmatpush2.msra.mxu0 0.0
      %1010 = vmatprep.subr.mxu0 0.0
      %1011 = vmatpush2.msra.mxu0 0.0
      %1012 = vmatprep.subr.mxu0 0.0
      %1013 = vmatpush2.msra.mxu0 0.0
      %1014 = vmatprep.subr.mxu0 0.0
      %1015 = vmatpush2.msra.mxu0 0.0
      %1016 = vmatprep.subr.mxu0 0.0
      %1017 = vmatpush2.msra.mxu0 0.0
      %1018 = vmatprep.mubr.f32.mxu0 0.0
      %1019 = vmatmul.mubr.f32.gmra.mxu0 %v949
      %v1020 = vpop.f32.mrf.mxu0
      %v1021 = vadd.f32 %v946, %v1020
      %v1022 = vpop.f32.mrf.mxu0
      %1023 = vmatprep.mubr.f32.mxu0 0.0
      %1024 = vmatmul.mubr.f32.gmra.mxu0 %v952
      %v1025 = vpop.f32.mrf.mxu0
      %v1026 = vadd.f32 %v946, %v1025
      %v1027 = vpop.f32.mrf.mxu0
      %1028 = vdwg.mxu0
      %1029 = vst.msk [vmem:[#allocation3] sm:$0xff] %vm918, %v1021
      %1030 = vst.msk [vmem:[#allocation3 + $0x8] sm:$0xff] %vm918, %v1026
      %v1031 = vmul.f32 %v1021, %v1021
      %v1032 = vmul.f32 %v1026, %v1026
      %v1033 = vsel %vm918, %v1031, 0.0
      %1034 = vadd.xlane.f32.xlu0 %v1033
      %v1035 = vpop.xlane.xlu0 %1034
      %v1036 = vsel %vm918, %v1032, 0.0
      %1037 = vadd.xlane.f32.xlu0 %v1036
      %v1038 = vpop.xlane.xlu0 %1037
      %v1039 = vld [vmem:[%s5] sm:$0xff]
      %v1040 = vld [vmem:[%s5 + $0x8] sm:$0xff]
      %v1041 = vld [vmem:[%s5 + $0x10] sm:$0xff]
      %v1042 = vld [vmem:[%s5 + $0x18] sm:$0xff]
      %v1044 = vsel %vm918, %v1021, 0
      %v1047 = vsel %vm918, %v1026, 0
      %1049 = vmatprep.subr.mxu0 0.0
      %1050 = vmatpush1.msra.mxu0 0.0
      %1051 = vmatprep.subr.mxu0 0.0
      %1052 = vmatpush1.msra.mxu0 0.0
      %1053 = vmatprep.subr.mxu0 0.0
      %1054 = vmatpush1.msra.mxu0 0.0
      %1055 = vmatprep.subr.mxu0 0.0
      %1056 = vmatpush1.msra.mxu0 0.0
      %1057 = vmatprep.subr.mxu0 0.0
      %1058 = vmatpush1.msra.mxu0 0.0
      %1059 = vmatprep.subr.mxu0 0.0
      %1060 = vmatpush1.msra.mxu0 0.0
      %1061 = vmatprep.subr.mxu0 0.0
      %1062 = vmatpush1.msra.mxu0 0.0
      %1063 = vmatprep.subr.mxu0 0.0
      %1064 = vmatpush1.msra.mxu0 0.0
      %1065 = vmatprep.subr.mxu0 0.0
      %1066 = vmatpush1.msra.mxu0 0.0
      %1067 = vmatprep.subr.mxu0 0.0
      %1068 = vmatpush1.msra.mxu0 0.0
      %1069 = vmatprep.subr.mxu0 0.0
      %1070 = vmatpush1.msra.mxu0 0.0
      %1071 = vmatprep.subr.mxu0 0.0
      %1072 = vmatpush1.msra.mxu0 0.0
      %1073 = vmatprep.subr.mxu0 0.0
      %1074 = vmatpush1.msra.mxu0 %v1042
      %1075 = vmatprep.subr.mxu0 0.0
      %1076 = vmatpush1.msra.mxu0 %v1041
      %1077 = vmatprep.subr.mxu0 0.0
      %1078 = vmatpush1.msra.mxu0 %v1040
      %1079 = vmatprep.subr.mxu0 0.0
      %1080 = vmatpush1.msra.mxu0 %v1039
      %1081 = vmatprep.subr.mxu0 0.0
      %1082 = vmatpush2.msra.mxu0 0.0
      %1083 = vmatprep.subr.mxu0 0.0
      %1084 = vmatpush2.msra.mxu0 0.0
      %1085 = vmatprep.subr.mxu0 0.0
      %1086 = vmatpush2.msra.mxu0 0.0
      %1087 = vmatprep.subr.mxu0 0.0
      %1088 = vmatpush2.msra.mxu0 0.0
      %1089 = vmatprep.subr.mxu0 0.0
      %1090 = vmatpush2.msra.mxu0 0.0
      %1091 = vmatprep.subr.mxu0 0.0
      %1092 = vmatpush2.msra.mxu0 0.0
      %1093 = vmatprep.subr.mxu0 0.0
      %1094 = vmatpush2.msra.mxu0 0.0
      %1095 = vmatprep.subr.mxu0 0.0
      %1096 = vmatpush2.msra.mxu0 0.0
      %1097 = vmatprep.subr.mxu0 0.0
      %1098 = vmatpush2.msra.mxu0 0.0
      %1099 = vmatprep.subr.mxu0 0.0
      %1100 = vmatpush2.msra.mxu0 0.0
      %1101 = vmatprep.subr.mxu0 0.0
      %1102 = vmatpush2.msra.mxu0 0.0
      %1103 = vmatprep.subr.mxu0 0.0
      %1104 = vmatpush2.msra.mxu0 0.0
      %1105 = vmatprep.subr.mxu0 0.0
      %1106 = vmatpush2.msra.mxu0 0.0
      %1107 = vmatprep.subr.mxu0 0.0
      %1108 = vmatpush2.msra.mxu0 0.0
      %1109 = vmatprep.subr.mxu0 0.0
      %1110 = vmatpush2.msra.mxu0 0.0
      %1111 = vmatprep.subr.mxu0 0.0
      %1112 = vmatpush2.msra.mxu0 0.0
      %1113 = vmatprep.mubr.f32.mxu0 0.0
      %1114 = vmatmul.mubr.f32.gmra.mxu0 %v1044
      %v1115 = vpop.f32.mrf.mxu0
      %v1116 = vadd.f32 0.0, %v1115
      %v1117 = vpop.f32.mrf.mxu0
      %1118 = vmatprep.mubr.f32.mxu0 0.0
      %1119 = vmatmul.mubr.f32.gmra.mxu0 %v1047
      %v1120 = vpop.f32.mrf.mxu0
      %v1121 = vadd.f32 0.0, %v1120
      %v1122 = vpop.f32.mrf.mxu0
      %1123 = vdwg.mxu0
      %v1124 = vld [vmem:[%s6] sm:$0x1]
      %v1126 = vlaneseq
      %v1127 = vshrl.u32 %v1126, 7
      %v1128 = vsub.s32 0, %v1127
      %v1129 = vrot.slane %v1124, %v1128
      %v1131 = vadd.f32 %v1035, %v1129
      %v1132 = vadd.f32 %v1038, %v1129
      %v1133 = vmul.f32 %v1116, 2.0
      %v1134 = vmul.f32 %v1121, 2.0
      %v1135 = vsub.f32 %v1131, %v1133
      %v1136 = vsub.f32 %v1132, %v1134
      %v1137 = vmax.f32 %v1135, 0.0
      %v1138 = vmax.f32 %v1136, 0.0
      %v1139 = vrsqrt.pop %v1137
      %v1140 = vmul.f32 %v1137, %v1139
      %vm1141 = vcmp.eq.f32.partialorder %v1137, inf
      %v1142 = vsel %vm1141, %v1137, %v1140
      %vm1143 = vcmp.eq.f32.partialorder %v1137, 0.0
      %v1144 = vand.u32 %v1137, 2147483648
      %v1145 = vsel %vm1143, %v1144, %v1142
      %v1146 = vrsqrt.pop %v1138
      %v1147 = vmul.f32 %v1138, %v1146
      %vm1148 = vcmp.eq.f32.partialorder %v1138, inf
      %v1149 = vsel %vm1148, %v1138, %v1147
      %vm1150 = vcmp.eq.f32.partialorder %v1138, 0.0
      %v1151 = vand.u32 %v1138, 2147483648
      %v1152 = vsel %vm1150, %v1151, %v1149
      %v1153 = vsub.f32 0.0, %v1145
      %v1154 = vsub.f32 0.0, %v1152
      %1155 = vst [vmem:[#allocation5] sm:$0xff] %v1153
      %1156 = vst [vmem:[#allocation5 + $0x8] sm:$0xff] %v1154
    $region37: #{tpu_custom_call.1} parent=1 // pred_fallthru
      _
    // Predicated region
    $region38: #{tpu_custom_call.1} parent=1 // pred_check
      _
    $region39: #{tpu_custom_call.1} parent=1 // pred_check_branch
      %1158 = sbr.rel (0) target = $region41
    $region40: #{tpu_custom_call.1} parent=1 // pred_region
      %s1160 = ssub.s32 256, 32
      %1161 = vsyncadd [#allocation4], %s1160
      %s1162 = sshll.u32 [#allocation3], 4
      %s1163 = int_to_ptr.vmem [resolvable:$true] %s1162
      %1168 = dma.vmem_to_hbm [thread:$0]  %s1163, 32, %s7, [#allocation4], 32, 32, 2
    $region41: #{tpu_custom_call.1} parent=1 // pred_fallthru
      _
    // Predicated region
    $region42: #{tpu_custom_call.1} parent=1 // pred_check
      _
    $region43: #{tpu_custom_call.1} parent=1 // pred_check_branch
      %1170 = sbr.rel (0) target = $region45
    $region44: #{tpu_custom_call.1} parent=1 // pred_region
      %s1172 = ssub.s32 256, 32
      %1173 = vsyncadd [#allocation6], %s1172
      %s1174 = sshll.u32 [#allocation5], 4
      %s1175 = int_to_ptr.vmem [resolvable:$true] %s1174
      %1180 = dma.vmem_to_hbm [thread:$0]  %s1175, 32, %s8, [#allocation6], 32, 32, 2
    $region45: #{tpu_custom_call.1} parent=1 // pred_fallthru
      _
    // Predicated region
    $region46: #{tpu_custom_call.1} parent=1 // pred_check
      _
    $region47: #{tpu_custom_call.1} parent=1 // pred_check_branch
      %1182 = sbr.rel (0) target = $region49
    $region48: #{tpu_custom_call.1} parent=1 // pred_region
      %1183 = dma.done [#allocation4], 256
    $region49: #{tpu_custom_call.1} parent=1 // pred_fallthru
      _
    // Predicated region
    $region50: #{tpu_custom_call.1} parent=1 // pred_check
      _
    $region51: #{tpu_custom_call.1} parent=1 // pred_check_branch
      %1185 = sbr.rel (0) target = $region53
    $region52: #{tpu_custom_call.1} parent=1 // pred_region
      %1186 = dma.done [#allocation6], 256
    $region53: #{tpu_custom_call.1} parent=1 // pred_fallthru
      _
    %1187 = vsyncpa [#allocation4], 1
    %1188 = vsyncpa [#allocation6], 1

</llo_original>
